<compile_context>
chip_gen: v6e
topology: v6e:2x2x1
jax: 0.10.0
libtpu: 0.0.40
codegen_flags: <defaults>
</compile_context>

<pallas_src>
import functools

import jax
import jax.numpy as jnp
from jax.experimental import pallas as pl
from jax.experimental.pallas import tpu as pltpu


def _round_up(x, m):
    return ((x + m - 1) // m) * m


def net_kernel(x_ref, w1t_ref, w2t_ref, o_ref):
    # x: [TB, S], w1t: [S, H], w2t: [H, A]  (natural contractions -> MXU fed directly)
    x = x_ref[...]

    # fc1 + ReLU; f32 MXU accumulation regardless of operand dtype.
    h = jnp.dot(x, w1t_ref[...], preferred_element_type=jnp.float32)  # [TB, H]
    h = jnp.maximum(h, 0.0)

    # fc2 + ReLU (keep MXU operand dtype uniform; no-op cast in the f32 path).
    h = h.astype(w2t_ref.dtype)
    z = jnp.dot(h, w2t_ref[...], preferred_element_type=jnp.float32)  # [TB, A]
    z = jnp.maximum(z, 0.0)

    # Numerically stable softmax over the last dim, all in f32 (v5e-safe).
    m = jnp.max(z, axis=-1, keepdims=True)
    e = jnp.exp(z - m)
    denom = jnp.sum(e, axis=-1, keepdims=True)
    # Exact divide: rows sum to 1 within f32 rounding (approx reciprocal was not enough).
    o_ref[...] = (e / denom).astype(o_ref.dtype)


def prepare_params(fc1_weights, fc2_weights, dtype=jnp.float32):
    """One-time layout plumbing (hoisted out of the per-call path).

    fc1_weights: [H, S], fc2_weights: [A, H] (PyTorch nn.Linear layout).
    Returns w1t: [S, H], w2t: [H, A] in `dtype` (use jnp.bfloat16 on v6e/v7x to halve
    the streamed HBM bytes; f32 accumulation in-kernel preserves accuracy).
    """
    w1t = jnp.asarray(fc1_weights).T.astype(dtype)  # [S, H]
    w2t = jnp.asarray(fc2_weights).T.astype(dtype)  # [H, A]
    return w1t, w2t


@functools.partial(jax.jit, static_argnames=("tb",))
def net_forward(x, w1t, w2t, *, tb=4096):
    """x: [B, S]; w1t: [S, H]; w2t: [H, A] (already transposed by prepare_params)."""
    B, S = x.shape
    S2, H = w1t.shape
    H2, A = w2t.shape
    assert S == S2 and H == H2

    # Stream x in the same dtype as the weights (cast happens once, outside the kernel,
    # so the HBM->VMEM DMA moves the narrow dtype).
    x = x.astype(w1t.dtype)

    # Batch tile selection:
    #  * tiny batch: one step, whole batch.
    #  * otherwise: at least 2 steps (so v7x "parallel" axis uses both TensorCores),
    #    rows aligned to the sublane packing (8 for f32, 16 for bf16), capped at tb.
    row_align = 16 if w1t.dtype == jnp.bfloat16 else 8
    if B <= 16:
        TB = B
    else:
        TB = min(_round_up(tb, row_align), _round_up(pl.cdiv(B, 2), row_align))
    grid = (pl.cdiv(B, TB),)

    return pl.pallas_call(
        net_kernel,
        out_shape=jax.ShapeDtypeStruct((B, A), jnp.float32),
        grid=grid,
        in_specs=[
            pl.BlockSpec((TB, S), lambda i: (i, 0)),  # x streamed per batch tile
            pl.BlockSpec((S, H), lambda i: (0, 0)),   # weights resident across all tiles
            pl.BlockSpec((H, A), lambda i: (0, 0)),
        ],
        out_specs=pl.BlockSpec((TB, A), lambda i: (i, 0)),
        compiler_params=pltpu.CompilerParams(
            # Independent batch tiles -> shard across TensorCores on v7x.
            dimension_semantics=("parallel",)
        ),
    )(x, w1t, w2t)


def reference_forward(x, w1, w2):
    h = jnp.maximum(jnp.dot(x, w1.T, precision=jax.lax.Precision.HIGHEST), 0.0)
    z = jnp.maximum(jnp.dot(h, w2.T, precision=jax.lax.Precision.HIGHEST), 0.0)
    return jax.nn.softmax(z, axis=-1)


if __name__ == "__main__":
    # Shapes implied by the module: state_size=16, hidden_size=32, action_size=4, batch=2
    B, state_size, hidden_size, action_size = 2, 16, 32, 4

    key = jax.random.PRNGKey(0)
    kx, k1, k2, kb = jax.random.split(key, 4)
    x = jax.random.normal(kx, (B, state_size), dtype=jnp.float32)
    fc1_weights = jax.random.normal(k1, (hidden_size, state_size), dtype=jnp.float32) * 0.1
    fc2_weights = jax.random.normal(k2, (action_size, hidden_size), dtype=jnp.float32) * 0.1

    # One-time weight prep (transpose hoisted out of the forward path).
    w1t_f32, w2t_f32 = prepare_params(fc1_weights, fc2_weights, jnp.float32)

    # Small batch (single grid step).
    out = jax.block_until_ready(net_forward(x, w1t_f32, w2t_f32))
    ref = reference_forward(x, fc1_weights, fc2_weights)
    assert out.shape == (B, action_size)
    assert jnp.allclose(out, ref, atol=2e-3, rtol=2e-3), "mismatch vs reference (small batch)"
    assert jnp.allclose(jnp.sum(out, axis=-1), 1.0, atol=1e-4), "softmax rows must sum to 1"

    # Larger batch exercises the tiled / pipelined path (>= 2 grid steps).
    B_large = 1024
    x_large = jax.random.normal(kb, (B_large, state_size), dtype=jnp.float32)
    out_large = jax.block_until_ready(net_forward(x_large, w1t_f32, w2t_f32))
    ref_large = reference_forward(x_large, fc1_weights, fc2_weights)
    assert out_large.shape == (B_large, action_size)
    assert jnp.allclose(out_large, ref_large, atol=2e-3, rtol=2e-3), "mismatch vs reference (large batch)"
    assert jnp.allclose(jnp.sum(out_large, axis=-1), 1.0, atol=1e-4)

    # bf16 input stream (halved x HBM bytes on v6e/v7x), f32 accumulate + f32 softmax.
    w1t_bf16, w2t_bf16 = prepare_params(fc1_weights, fc2_weights, jnp.bfloat16)
    out_bf16 = jax.block_until_ready(net_forward(x_large, w1t_bf16, w2t_bf16))
    assert out_bf16.shape == (B_large, action_size)
    assert jnp.allclose(out_bf16, ref_large, atol=2e-2, rtol=2e-2), "mismatch vs reference (bf16 path)"
    assert jnp.allclose(jnp.sum(out_bf16, axis=-1), 1.0, atol=1e-4)

    print("KERNEL_OK")
</pallas_src>

<mosaic_0001>
module attributes {stable_mosaic.version = 11 : i64} {
  func.func @net_kernel(%arg0: i32, %arg1: memref<2x16xf32, #tpu.memory_space<vmem>>, %arg2: memref<16x32xf32, #tpu.memory_space<vmem>>, %arg3: memref<32x4xf32, #tpu.memory_space<vmem>>, %arg4: memref<2x4xf32, #tpu.memory_space<vmem>>) attributes {dimension_semantics = [#tpu.dimension_semantics<parallel>], iteration_bounds = array<i64: 1>, scalar_prefetch = 0 : i64, scratch_operands = 0 : i64, tpu.core_type = #tpu.core_type<tc>, window_params = [{transform_indices = @transform_0, window_bounds = array<i64: 2, 16>}, {pipeline_mode = #tpu.pipeline_mode<synchronous>, transform_indices = @transform_1, window_bounds = array<i64: 16, 32>}, {pipeline_mode = #tpu.pipeline_mode<synchronous>, transform_indices = @transform_2, window_bounds = array<i64: 32, 4>}, {transform_indices = @transform_3, window_bounds = array<i64: 2, 4>}]} {
    %c0 = arith.constant 0 : index
    %c0_0 = arith.constant 0 : index
    %0 = vector.load %arg1[%c0, %c0_0] : memref<2x16xf32, #tpu.memory_space<vmem>>, vector<2x16xf32>
    %c0_1 = arith.constant 0 : index
    %c0_2 = arith.constant 0 : index
    %1 = vector.load %arg2[%c0_1, %c0_2] : memref<16x32xf32, #tpu.memory_space<vmem>>, vector<16x32xf32>
    %cst = arith.constant dense<0.000000e+00> : vector<2x32xf32>
    %2 = tpu.matmul %0, %1, %cst {dimension_numbers = #tpu.dot_dimension_numbers<[1], [0], [0], [1], [0, 0, 1, 1], [], []>} : vector<2x16xf32>, vector<16x32xf32>, vector<2x32xf32> -> vector<2x32xf32>
    %cst_3 = arith.constant 0.000000e+00 : f32
    %3 = vector.broadcast %cst_3 : f32 to vector<2x32xf32>
    %4 = arith.maximumf %2, %3 : vector<2x32xf32>
    %c0_4 = arith.constant 0 : index
    %c0_5 = arith.constant 0 : index
    %5 = vector.load %arg3[%c0_4, %c0_5] : memref<32x4xf32, #tpu.memory_space<vmem>>, vector<32x4xf32>
    %cst_6 = arith.constant dense<0.000000e+00> : vector<2x4xf32>
    %6 = tpu.matmul %4, %5, %cst_6 {dimension_numbers = #tpu.dot_dimension_numbers<[1], [0], [0], [1], [0, 0, 1, 1], [], []>} : vector<2x32xf32>, vector<32x4xf32>, vector<2x4xf32> -> vector<2x4xf32>
    %cst_7 = arith.constant 0.000000e+00 : f32
    %7 = vector.broadcast %cst_7 : f32 to vector<2x4xf32>
    %8 = arith.maximumf %6, %7 : vector<2x4xf32>
    %cst_8 = arith.constant dense<0xFF800000> : vector<2xf32>
    %9 = vector.multi_reduction <maximumf>, %8, %cst_8 [1] : vector<2x4xf32> to vector<2xf32>
    %10 = vector.shape_cast %9 : vector<2xf32> to vector<2x1xf32>
    %11 = vector.broadcast %10 : vector<2x1xf32> to vector<2x4xf32>
    %12 = arith.subf %8, %11 : vector<2x4xf32>
    %13 = math.exp %12 : vector<2x4xf32>
    %cst_9 = arith.constant dense<0.000000e+00> : vector<2xf32>
    %14 = vector.multi_reduction <add>, %13, %cst_9 [1] : vector<2x4xf32> to vector<2xf32>
    %15 = vector.shape_cast %14 : vector<2xf32> to vector<2x1xf32>
    %16 = vector.broadcast %15 : vector<2x1xf32> to vector<2x4xf32>
    %17 = arith.divf %13, %16 : vector<2x4xf32>
    %c0_10 = arith.constant 0 : index
    %c0_11 = arith.constant 0 : index
    %18 = vector.load %arg4[%c0_10, %c0_11] : memref<2x4xf32, #tpu.memory_space<vmem>>, vector<2x4xf32>
    tpu.vector_store %arg4[%c0_10, %c0_11], %17 {strides = array<i32>} : memref<2x4xf32, #tpu.memory_space<vmem>>, vector<2x4xf32>,
    return
  }
  func.func @transform_0(%arg0: i32) -> (i32, i32) {
    %c0_i32 = arith.constant 0 : i32
    %c0_i32_0 = arith.constant 0 : i32
    return %arg0, %c0_i32 : i32, i32
  }
  func.func @transform_1(%arg0: i32) -> (i32, i32) {
    %c0_i32 = arith.constant 0 : i32
    %c0_i32_0 = arith.constant 0 : i32
    %c0_i32_1 = arith.constant 0 : i32
    return %c0_i32, %c0_i32_0 : i32, i32
  }
  func.func @transform_2(%arg0: i32) -> (i32, i32) {
    %c0_i32 = arith.constant 0 : i32
    %c0_i32_0 = arith.constant 0 : i32
    %c0_i32_1 = arith.constant 0 : i32
    return %c0_i32, %c0_i32_0 : i32, i32
  }
  func.func @transform_3(%arg0: i32) -> (i32, i32) {
    %c0_i32 = arith.constant 0 : i32
    %c0_i32_0 = arith.constant 0 : i32
    return %arg0, %c0_i32 : i32, i32
  }
}

</mosaic_0001>

<llo_original>
// kernel: net_forward.1
$region0: #{net_forward.1}
  #allocation0 [shape = 'u32[]', space=smem, size = 0x4, offset = 0x4, fixed_abs, tag = 'smem constant byte address 0x4 - core index']
  #allocation1 [shape = 'u32[144,128]{1,0:T(1,128)}', space=vmem, size = 0x12000, scoped, tag = 'internal scratch']
  %s0 = inlined_call_operand.vmem [shape: f32[2,16], index: 0, kind: input, shape index: {}]
  %s1 = inlined_call_operand.vmem [shape: f32[16,32], index: 1, kind: input, shape index: {}]
  %s2 = inlined_call_operand.vmem [shape: f32[32,4], index: 2, kind: input, shape index: {}]
  %s3 = inlined_call_operand.hbm [shape: f32[2,4], index: 3, kind: output, shape index: {}]
  %s4 = sld [smem:[#allocation0]]
  $region22: #{net_forward.1} parent=0
    _
  %s6 = ssub.s32 1, %s4
  %s7 = scalar_select 0, %s6, %s4
  $region1: #{net_forward.1} parent=0
    #allocation2 [shape = 'u8[1024]{0}', space=vmem, size = 0x400, scoped, tag = 'output window, operand 0, single buffered']
    #allocation3 [shape = 's32[1]{0}', space=sflag, size = 0x4, scoped, tag = 'scoped memory for net_forward.1']
    %8 = vsyncpa [#allocation3], 0
    // Predicated region
    $region2: #{net_forward.1} parent=1 // pred_check
      _
    $region3: #{net_forward.1} parent=1 // pred_check_branch
      %10 = sbr.rel (0) target = $region5
    $region4: #{net_forward.1} parent=1 // pred_region
      _
    $region5: #{net_forward.1} parent=1 // pred_fallthru
      _
    // Predicated region
    $region6: #{net_forward.1} parent=1 // pred_check
      _
    $region7: #{net_forward.1} parent=1 // pred_check_branch
      %12 = sbr.rel (0) target = $region9
    $region8: #{net_forward.1} parent=1 // pred_region
      _
    $region9: #{net_forward.1} parent=1 // pred_fallthru
      _
    // Predicated region
    $region10: #{net_forward.1} parent=1 // pred_check
      _
    $region11: #{net_forward.1} parent=1 // pred_check_branch
      %14 = sbr.rel (0) target = $region13
    $region12: #{net_forward.1} parent=1 // pred_region
      _
    $region13: #{net_forward.1} parent=1 // pred_fallthru
      _
    %v15 = vld [vmem:[%s0] sm:$0x3]
    %v16 = vld [vmem:[%s1] sm:$0xff]
    %v17 = vld [vmem:[%s1 + $0x8] sm:$0xff]
    %vm18 = vcmask 130048
    %v20 = vsel %vm18, %v15, 0
    %22 = vmatprep.subr.mxu0 0.0
    %23 = vmatpush1.msra.mxu0 0.0
    %24 = vmatprep.subr.mxu0 0.0
    %25 = vmatpush1.msra.mxu0 0.0
    %26 = vmatprep.subr.mxu0 0.0
    %27 = vmatpush1.msra.mxu0 0.0
    %28 = vmatprep.subr.mxu0 0.0
    %29 = vmatpush1.msra.mxu0 0.0
    %30 = vmatprep.subr.mxu0 0.0
    %31 = vmatpush1.msra.mxu0 0.0
    %32 = vmatprep.subr.mxu0 0.0
    %33 = vmatpush1.msra.mxu0 0.0
    %34 = vmatprep.subr.mxu0 0.0
    %35 = vmatpush1.msra.mxu0 0.0
    %36 = vmatprep.subr.mxu0 0.0
    %37 = vmatpush1.msra.mxu0 0.0
    %38 = vmatprep.subr.mxu0 0.0
    %39 = vmatpush1.msra.mxu0 0.0
    %40 = vmatprep.subr.mxu0 0.0
    %41 = vmatpush1.msra.mxu0 0.0
    %42 = vmatprep.subr.mxu0 0.0
    %43 = vmatpush1.msra.mxu0 0.0
    %44 = vmatprep.subr.mxu0 0.0
    %45 = vmatpush1.msra.mxu0 0.0
    %46 = vmatprep.subr.mxu0 0.0
    %47 = vmatpush1.msra.mxu0 0.0
    %48 = vmatprep.subr.mxu0 0.0
    %49 = vmatpush1.msra.mxu0 0.0
    %50 = vmatprep.subr.mxu0 0.0
    %51 = vmatpush1.msra.mxu0 %v17
    %52 = vmatprep.subr.mxu0 0.0
    %53 = vmatpush1.msra.mxu0 %v16
    %54 = vmatprep.subr.mxu0 0.0
    %55 = vmatpush2.msra.mxu0 0.0
    %56 = vmatprep.subr.mxu0 0.0
    %57 = vmatpush2.msra.mxu0 0.0
    %58 = vmatprep.subr.mxu0 0.0
    %59 = vmatpush2.msra.mxu0 0.0
    %60 = vmatprep.subr.mxu0 0.0
    %61 = vmatpush2.msra.mxu0 0.0
    %62 = vmatprep.subr.mxu0 0.0
    %63 = vmatpush2.msra.mxu0 0.0
    %64 = vmatprep.subr.mxu0 0.0
    %65 = vmatpush2.msra.mxu0 0.0
    %66 = vmatprep.subr.mxu0 0.0
    %67 = vmatpush2.msra.mxu0 0.0
    %68 = vmatprep.subr.mxu0 0.0
    %69 = vmatpush2.msra.mxu0 0.0
    %70 = vmatprep.subr.mxu0 0.0
    %71 = vmatpush2.msra.mxu0 0.0
    %72 = vmatprep.subr.mxu0 0.0
    %73 = vmatpush2.msra.mxu0 0.0
    %74 = vmatprep.subr.mxu0 0.0
    %75 = vmatpush2.msra.mxu0 0.0
    %76 = vmatprep.subr.mxu0 0.0
    %77 = vmatpush2.msra.mxu0 0.0
    %78 = vmatprep.subr.mxu0 0.0
    %79 = vmatpush2.msra.mxu0 0.0
    %80 = vmatprep.subr.mxu0 0.0
    %81 = vmatpush2.msra.mxu0 0.0
    %82 = vmatprep.subr.mxu0 0.0
    %83 = vmatpush2.msra.mxu0 0.0
    %84 = vmatprep.subr.mxu0 0.0
    %85 = vmatpush2.msra.mxu0 0.0
    %86 = vmatprep.mubr.f32.mxu0 0.0
    %87 = vmatmul.mubr.f32.gmra.mxu0 %v20
    %v88 = vpop.f32.mrf.mxu0
    %v89 = vadd.f32 0.0, %v88
    %v90 = vpop.f32.mrf.mxu0
    %91 = vdwg.mxu0
    %v92 = vmax.f32 %v89, 0.0
    %v93 = vld [vmem:[%s2] sm:$0xff]
    %v94 = vld [vmem:[%s2 + $0x8] sm:$0xff]
    %v95 = vld [vmem:[%s2 + $0x10] sm:$0xff]
    %v96 = vld [vmem:[%s2 + $0x18] sm:$0xff]
    %vm97 = vcmask 261120
    %v99 = vsel %vm97, %v92, 0
    %101 = vmatprep.subr.mxu0 0.0
    %102 = vmatpush1.msra.mxu0 0.0
    %103 = vmatprep.subr.mxu0 0.0
    %104 = vmatpush1.msra.mxu0 0.0
    %105 = vmatprep.subr.mxu0 0.0
    %106 = vmatpush1.msra.mxu0 0.0
    %107 = vmatprep.subr.mxu0 0.0
    %108 = vmatpush1.msra.mxu0 0.0
    %109 = vmatprep.subr.mxu0 0.0
    %110 = vmatpush1.msra.mxu0 0.0
    %111 = vmatprep.subr.mxu0 0.0
    %112 = vmatpush1.msra.mxu0 0.0
    %113 = vmatprep.subr.mxu0 0.0
    %114 = vmatpush1.msra.mxu0 0.0
    %115 = vmatprep.subr.mxu0 0.0
    %116 = vmatpush1.msra.mxu0 0.0
    %117 = vmatprep.subr.mxu0 0.0
    %118 = vmatpush1.msra.mxu0 0.0
    %119 = vmatprep.subr.mxu0 0.0
    %120 = vmatpush1.msra.mxu0 0.0
    %121 = vmatprep.subr.mxu0 0.0
    %122 = vmatpush1.msra.mxu0 0.0
    %123 = vmatprep.subr.mxu0 0.0
    %124 = vmatpush1.msra.mxu0 0.0
    %125 = vmatprep.subr.mxu0 0.0
    %126 = vmatpush1.msra.mxu0 %v96
    %127 = vmatprep.subr.mxu0 0.0
    %128 = vmatpush1.msra.mxu0 %v95
    %129 = vmatprep.subr.mxu0 0.0
    %130 = vmatpush1.msra.mxu0 %v94
    %131 = vmatprep.subr.mxu0 0.0
    %132 = vmatpush1.msra.mxu0 %v93
    %133 = vmatprep.subr.mxu0 0.0
    %134 = vmatpush2.msra.mxu0 0.0
    %135 = vmatprep.subr.mxu0 0.0
    %136 = vmatpush2.msra.mxu0 0.0
    %137 = vmatprep.subr.mxu0 0.0
    %138 = vmatpush2.msra.mxu0 0.0
    %139 = vmatprep.subr.mxu0 0.0
    %140 = vmatpush2.msra.mxu0 0.0
    %141 = vmatprep.subr.mxu0 0.0
    %142 = vmatpush2.msra.mxu0 0.0
    %143 = vmatprep.subr.mxu0 0.0
    %144 = vmatpush2.msra.mxu0 0.0
    %145 = vmatprep.subr.mxu0 0.0
    %146 = vmatpush2.msra.mxu0 0.0
    %147 = vmatprep.subr.mxu0 0.0
    %148 = vmatpush2.msra.mxu0 0.0
    %149 = vmatprep.subr.mxu0 0.0
    %150 = vmatpush2.msra.mxu0 0.0
    %151 = vmatprep.subr.mxu0 0.0
    %152 = vmatpush2.msra.mxu0 0.0
    %153 = vmatprep.subr.mxu0 0.0
    %154 = vmatpush2.msra.mxu0 0.0
    %155 = vmatprep.subr.mxu0 0.0
    %156 = vmatpush2.msra.mxu0 0.0
    %157 = vmatprep.subr.mxu0 0.0
    %158 = vmatpush2.msra.mxu0 0.0
    %159 = vmatprep.subr.mxu0 0.0
    %160 = vmatpush2.msra.mxu0 0.0
    %161 = vmatprep.subr.mxu0 0.0
    %162 = vmatpush2.msra.mxu0 0.0
    %163 = vmatprep.subr.mxu0 0.0
    %164 = vmatpush2.msra.mxu0 0.0
    %165 = vmatprep.mubr.f32.mxu0 0.0
    %166 = vmatmul.mubr.f32.gmra.mxu0 %v99
    %v167 = vpop.f32.mrf.mxu0
    %v168 = vadd.f32 0.0, %v167
    %v169 = vpop.f32.mrf.mxu0
    %170 = vdwg.mxu0
    %v171 = vmax.f32 %v168, 0.0
    %vm172 = vcmask 25600
    %v173 = vsel %vm172, %v171, -inf
    %174 = vmax.xlane.f32.xlu0 %v173
    %v175 = vpop.xlane.xlu0 %174
    %v176 = vsub.f32 %v171, %v175
    %v177 = vmul.f32 %v176, 1.442695
    %v178 = vpow.pop %v177
    %v179 = vsel %vm172, %v178, 0.0
    %180 = vadd.xlane.f32.xlu0 %v179
    %v181 = vpop.xlane.xlu0 %180
    %v182 = vrcp.pop %v181
    %v183 = vmul.f32 %v178, %v182
    %184 = vst.msk [vmem:[#allocation2] sm:$0x3] %vm172, %v183
    // Predicated region
    $region14: #{net_forward.1} parent=1 // pred_check
      _
    $region15: #{net_forward.1} parent=1 // pred_check_branch
      %186 = sbr.rel (0) target = $region17
    $region16: #{net_forward.1} parent=1 // pred_region
      %s188 = ssub.s32 32, 32
      %189 = vsyncadd [#allocation3], %s188
      %s191 = sshll.u32 [#allocation2], 4
      %s192 = int_to_ptr.vmem [resolvable:$true] %s191
      %194 = dma.vmem_to_hbm [thread:$0]  %s192, 32, %s3, [#allocation3]
    $region17: #{net_forward.1} parent=1 // pred_fallthru
      _
    // Predicated region
    $region18: #{net_forward.1} parent=1 // pred_check
      _
    $region19: #{net_forward.1} parent=1 // pred_check_branch
      %196 = sbr.rel (0) target = $region21
    $region20: #{net_forward.1} parent=1 // pred_region
      %197 = dma.done [#allocation3], 32
    $region21: #{net_forward.1} parent=1 // pred_fallthru
      _
    %198 = vsyncpa [#allocation3], 1

</llo_original>
